<compile_context>
chip_gen: v7x
topology: tpu7x:2x2x1
jax: 0.10.0
libtpu: 0.0.40
codegen_flags: <defaults>
</compile_context>

<pallas_src>
import functools

import jax
import jax.numpy as jnp
from jax.experimental import pallas as pl
from jax.experimental.pallas import tpu as pltpu


# ---------------------------------------------------------------------------
# Kernels
# ---------------------------------------------------------------------------

def _fused_kernel(x_ref, w1_ref, w2_ref, o_ref, *, hw):
    """Single-read path: one (1, C, HW) slab resident in VMEM.

    Spatial sum, excite MLP gate and the scaled output are all computed from
    the same VMEM copy of x (x is read from HBM exactly once).
    """
    x = x_ref[0]                                                  # (C, HW), input dtype
    s = jnp.sum(x.astype(jnp.float32), axis=1, keepdims=True)     # (C, 1) f32
    mean = s * (1.0 / hw)
    h = jnp.dot(w1_ref[...], mean, preferred_element_type=jnp.float32)   # (C_red, 1)
    h = h * jax.nn.sigmoid(h)                                     # SiLU
    g = jax.nn.sigmoid(
        jnp.dot(w2_ref[...], h, preferred_element_type=jnp.float32))     # (C, 1)
    o_ref[0] = x * g.astype(x.dtype)                              # lane broadcast


def _sum_gate_kernel(x_ref, w1_ref, w2_ref, g_ref, sum_ref, *, hw_total, hw_tile):
    """Pass 1: tiled spatial sum over HW (lane reduction) + fused excite MLP.

    sum_ref is an f32 VMEM scratch resident across the HW ("arbitrary") grid
    axis; on the final HW step the tiny MLP runs and the gate (1, C, 1) is
    emitted already in x.dtype.
    """
    t = pl.program_id(1)
    nt = pl.num_programs(1)
    last = t == nt - 1

    @pl.when(t == 0)
    def _():
        sum_ref[...] = jnp.zeros_like(sum_ref)

    x = x_ref[0].astype(jnp.float32)                              # (C, T)
    rem = hw_total % hw_tile
    if rem != 0:
        # Boundary masking scoped to the last (padded) tile only; interior
        # tiles take the cheap unmasked reduction.
        @pl.when(jnp.logical_not(last))
        def _():
            sum_ref[...] += jnp.sum(x, axis=1, keepdims=True)

        @pl.when(last)
        def _():
            lane = jax.lax.broadcasted_iota(jnp.int32, x.shape, 1)
            xm = jnp.where(lane < rem, x, 0.0)
            sum_ref[...] += jnp.sum(xm, axis=1, keepdims=True)
    else:
        sum_ref[...] += jnp.sum(x, axis=1, keepdims=True)

    @pl.when(last)
    def _():
        mean = sum_ref[...] * (1.0 / hw_total)                    # (C, 1) f32
        h = jnp.dot(w1_ref[...], mean, preferred_element_type=jnp.float32)
        h = h * jax.nn.sigmoid(h)                                 # SiLU
        g = jnp.dot(w2_ref[...], h, preferred_element_type=jnp.float32)
        g_ref[0] = jax.nn.sigmoid(g).astype(g_ref.dtype)


def _scale_kernel(x_ref, g_ref, o_ref):
    """Pass 2: lane-dense elementwise scale in the input dtype."""
    o_ref[0] = x_ref[0] * g_ref[0]


# ---------------------------------------------------------------------------
# Tiling / wrapper
# ---------------------------------------------------------------------------

def _pick_hw_tile(hw, c, itemsize, budget_bytes):
    """Largest multiple-of-128 lane tile under a per-block VMEM budget.

    Non-divisor tiles are fine: the grid uses cdiv and the boundary tile is
    masked in the reduction pass; pass 2's OOB output lanes are discarded.
    """
    max_lanes = max(128, (budget_bytes // max(1, c * itemsize)) // 128 * 128)
    if hw <= max_lanes:
        return hw                      # one full-HW block (block dim == array dim)
    return min(max_lanes, (hw // 128) * 128)


def se_block(x_nchw, w1, w2, *,
             block_budget_bytes=4 * 1024 * 1024,
             fused_slab_limit_bytes=16 * 1024 * 1024):
    """x_nchw: (N, C, H, W); w1: (C_red, C); w2: (C, C_red) PyTorch Linear weights."""
    N, C, H, W = x_nchw.shape
    C_red = w1.shape[0]
    HW = H * W
    itemsize = x_nchw.dtype.itemsize
    MB = 1024 * 1024

    # NCHW -> (N, C, HW): contiguous reshape, no transpose, no extra HBM pass.
    x = x_nchw.reshape(N, C, HW)
    w1_f32 = w1.astype(jnp.float32)
    w2_f32 = w2.astype(jnp.float32)
    w_bytes = int((w1.size + w2.size) * 4)

    # Note: for bf16/fp8 activations C should ideally be a multiple of 16/32 so
    # sublanes pack fully; small C (like the test case) only wastes vreg rows.
    slab_bytes = C * HW * itemsize

    # ---- Fused single-read path: x + out slabs (double-buffered) fit VMEM ----
    if 4 * slab_bytes + w_bytes <= fused_slab_limit_bytes:
        vmem_limit = min(max(32 * MB, int(4 * slab_bytes * 1.5)), 48 * MB)
        out = pl.pallas_call(
            functools.partial(_fused_kernel, hw=HW),
            out_shape=jax.ShapeDtypeStruct((N, C, HW), x.dtype),
            grid_spec=pltpu.PrefetchScalarGridSpec(
                num_scalar_prefetch=0,
                grid=(N,),
                in_specs=[
                    pl.BlockSpec((1, C, HW), lambda n: (n, 0, 0)),
                    pl.BlockSpec((C_red, C), lambda n: (0, 0)),
                    pl.BlockSpec((C, C_red), lambda n: (0, 0)),
                ],
                out_specs=pl.BlockSpec((1, C, HW), lambda n: (n, 0, 0)),
            ),
            compiler_params=pltpu.CompilerParams(
                # TODO(synk): on v7x with N == 1 this leaves one TensorCore idle;
                # a C/HW-split variant would be needed to shard the fused pass.
                dimension_semantics=("parallel",),
                vmem_limit_bytes=vmem_limit),
            cost_estimate=pl.CostEstimate(
                flops=2 * N * C * HW,
                transcendentals=N * (C_red + C),
                bytes_accessed=2 * N * C * HW * itemsize + w_bytes),
        )(x, w1_f32, w2_f32)
        return out.reshape(N, C, H, W)

    # ---- Two-pass path: tiled HW reduction (+ fused MLP), then tiled scale ----
    t_hw = _pick_hw_tile(HW, C, itemsize, block_budget_bytes)
    n_hw = pl.cdiv(HW, t_hw)
    blk_bytes = C * t_hw * itemsize
    vmem_limit = min(max(32 * MB, 6 * blk_bytes), 48 * MB)

    # Pass 1: per-(n, c) spatial sum over HW + excite MLP -> gate (N, C, 1) in x.dtype
    gate = pl.pallas_call(
        functools.partial(_sum_gate_kernel, hw_total=HW, hw_tile=t_hw),
        out_shape=jax.ShapeDtypeStruct((N, C, 1), x.dtype),
        grid_spec=pltpu.PrefetchScalarGridSpec(
            num_scalar_prefetch=0,
            grid=(N, n_hw),
            in_specs=[
                pl.BlockSpec((1, C, t_hw), lambda n, t: (n, 0, t)),
                pl.BlockSpec((C_red, C), lambda n, t: (0, 0)),
                pl.BlockSpec((C, C_red), lambda n, t: (0, 0)),
            ],
            out_specs=pl.BlockSpec((1, C, 1), lambda n, t: (n, 0, 0)),
            scratch_shapes=[pltpu.VMEM((C, 1), jnp.float32)],
        ),
        compiler_params=pltpu.CompilerParams(
            dimension_semantics=("parallel", "arbitrary"),
            vmem_limit_bytes=vmem_limit),
        cost_estimate=pl.CostEstimate(
            flops=N * C * HW,
            transcendentals=N * (C_red + C),
            bytes_accessed=N * C * HW * itemsize + N * C * itemsize + w_bytes),
    )(x, w1_f32, w2_f32)

    # Pass 2: lane-dense tiled elementwise scale (gate already in x.dtype).
    out = pl.pallas_call(
        _scale_kernel,
        out_shape=jax.ShapeDtypeStruct((N, C, HW), x.dtype),
        grid_spec=pltpu.PrefetchScalarGridSpec(
            num_scalar_prefetch=0,
            grid=(N, n_hw),
            in_specs=[
                pl.BlockSpec((1, C, t_hw), lambda n, t: (n, 0, t)),
                pl.BlockSpec((1, C, 1), lambda n, t: (n, 0, 0)),
            ],
            out_specs=pl.BlockSpec((1, C, t_hw), lambda n, t: (n, 0, t)),
        ),
        compiler_params=pltpu.CompilerParams(
            dimension_semantics=("parallel", "parallel"),
            vmem_limit_bytes=vmem_limit),
        cost_estimate=pl.CostEstimate(
            flops=N * C * HW,
            transcendentals=0,
            bytes_accessed=2 * N * C * HW * itemsize + N * C * itemsize),
    )(x, gate)

    return out.reshape(N, C, H, W)


def se_block_ref(x, w1, w2):
    """Pure-JAX reference mirroring the PyTorch module."""
    y = jnp.mean(x, axis=(2, 3), keepdims=True)              # (N, C, 1, 1)
    y = jnp.transpose(y, (0, 2, 3, 1))                       # n c h w -> n h w c
    h = y @ w1.T                                             # Linear(C -> C_red), no bias
    h = h * jax.nn.sigmoid(h)                                # SiLU
    g = h @ w2.T                                             # Linear(C_red -> C), no bias
    g = jnp.transpose(g, (0, 3, 1, 2))                       # n h w c -> n c h w
    g = jax.nn.sigmoid(g)
    return x * g


if __name__ == "__main__":
    # SEBlock(input_dim=4, contraction_factor=2)
    N, C, H, W = 2, 4, 16, 16
    C_red = C // 2

    key = jax.random.PRNGKey(0)
    kx, k1, k2 = jax.random.split(key, 3)
    x = jax.random.normal(kx, (N, C, H, W), dtype=jnp.float32)
    # Deterministic synthetic parameters (bias-free Linear layers)
    w1 = jax.random.normal(k1, (C_red, C), dtype=jnp.float32) * 0.5
    w2 = jax.random.normal(k2, (C, C_red), dtype=jnp.float32) * 0.5

    # Fused single-read path (the normal path for this small shape).
    out = jax.block_until_ready(se_block(x, w1, w2))
    ref = jax.block_until_ready(se_block_ref(x, w1, w2))
    assert out.shape == (N, C, H, W)
    assert jnp.allclose(out, ref, atol=1e-5, rtol=1e-5), "fused-path mismatch"

    # Also exercise the tiled two-pass path (non-divisor HW tile + boundary
    # masking + fused-MLP finalize) by forcing tiny VMEM budgets at HW=18*18.
    x2 = jax.random.normal(kx, (N, C, 18, 18), dtype=jnp.float32)
    out2 = jax.block_until_ready(
        se_block(x2, w1, w2, fused_slab_limit_bytes=0, block_budget_bytes=2048))
    ref2 = jax.block_until_ready(se_block_ref(x2, w1, w2))
    assert jnp.allclose(out2, ref2, atol=1e-5, rtol=1e-5), "two-pass mismatch"

    print("KERNEL_OK")
</pallas_src>

<mosaic_0001>
module attributes {stable_mosaic.version = 11 : i64} {
  func.func @_fused_kernel(%arg0: i32, %arg1: memref<1x4x256xf32, #tpu.memory_space<vmem>>, %arg2: memref<2x4xf32, #tpu.memory_space<vmem>>, %arg3: memref<4x2xf32, #tpu.memory_space<vmem>>, %arg4: memref<1x4x256xf32, #tpu.memory_space<vmem>>) attributes {dimension_semantics = [#tpu.dimension_semantics<parallel>], iteration_bounds = array<i64: 2>, scalar_prefetch = 0 : i64, scratch_operands = 0 : i64, tpu.core_type = #tpu.core_type<tc>, window_params = [{transform_indices = @transform_0, window_bounds = array<i64: 1, 4, 256>}, {pipeline_mode = #tpu.pipeline_mode<synchronous>, transform_indices = @transform_1, window_bounds = array<i64: 2, 4>}, {pipeline_mode = #tpu.pipeline_mode<synchronous>, transform_indices = @transform_2, window_bounds = array<i64: 4, 2>}, {transform_indices = @transform_3, window_bounds = array<i64: 1, 4, 256>}]} {
    %c0 = arith.constant 0 : index
    %c0_0 = arith.constant 0 : index
    %c0_1 = arith.constant 0 : index
    %0 = vector.load %arg1[%c0, %c0_0, %c0_1] : memref<1x4x256xf32, #tpu.memory_space<vmem>>, vector<1x4x256xf32>
    %1 = vector.shape_cast %0 : vector<1x4x256xf32> to vector<4x256xf32>
    %cst = arith.constant dense<0.000000e+00> : vector<4xf32>
    %2 = vector.multi_reduction <add>, %1, %cst [1] : vector<4x256xf32> to vector<4xf32>
    %3 = vector.shape_cast %2 : vector<4xf32> to vector<4x1xf32>
    %cst_2 = arith.constant 3.906250e-03 : f32
    %4 = vector.broadcast %cst_2 : f32 to vector<4x1xf32>
    %5 = arith.mulf %3, %4 : vector<4x1xf32>
    %c0_3 = arith.constant 0 : index
    %c0_4 = arith.constant 0 : index
    %6 = vector.load %arg2[%c0_3, %c0_4] : memref<2x4xf32, #tpu.memory_space<vmem>>, vector<2x4xf32>
    %cst_5 = arith.constant dense<0.000000e+00> : vector<2x1xf32>
    %7 = tpu.matmul %6, %5, %cst_5 {dimension_numbers = #tpu.dot_dimension_numbers<[1], [0], [0], [1], [0, 0, 1, 1], [], []>} : vector<2x4xf32>, vector<4x1xf32>, vector<2x1xf32> -> vector<2x1xf32>
    %8 = arith.negf %7 : vector<2x1xf32>
    %9 = math.exp %8 : vector<2x1xf32>
    %cst_6 = arith.constant 1.000000e+00 : f32
    %10 = vector.broadcast %cst_6 : f32 to vector<2x1xf32>
    %11 = arith.addf %10, %9 : vector<2x1xf32>
    %12 = arith.divf %10, %11 : vector<2x1xf32>
    %13 = arith.mulf %7, %12 : vector<2x1xf32>
    %c0_7 = arith.constant 0 : index
    %c0_8 = arith.constant 0 : index
    %14 = vector.load %arg3[%c0_7, %c0_8] : memref<4x2xf32, #tpu.memory_space<vmem>>, vector<4x2xf32>
    %cst_9 = arith.constant dense<0.000000e+00> : vector<4x1xf32>
    %15 = tpu.matmul %14, %13, %cst_9 {dimension_numbers = #tpu.dot_dimension_numbers<[1], [0], [0], [1], [0, 0, 1, 1], [], []>} : vector<4x2xf32>, vector<2x1xf32>, vector<4x1xf32> -> vector<4x1xf32>
    %16 = arith.negf %15 : vector<4x1xf32>
    %17 = math.exp %16 : vector<4x1xf32>
    %cst_10 = arith.constant 1.000000e+00 : f32
    %18 = vector.broadcast %cst_10 : f32 to vector<4x1xf32>
    %19 = arith.addf %18, %17 : vector<4x1xf32>
    %20 = arith.divf %18, %19 : vector<4x1xf32>
    %21 = vector.broadcast %20 : vector<4x1xf32> to vector<4x256xf32>
    %22 = arith.mulf %1, %21 : vector<4x256xf32>
    %c0_11 = arith.constant 0 : index
    %c0_12 = arith.constant 0 : index
    %c0_13 = arith.constant 0 : index
    %23 = vector.load %arg4[%c0_11, %c0_12, %c0_13] : memref<1x4x256xf32, #tpu.memory_space<vmem>>, vector<1x4x256xf32>
    %24 = vector.shape_cast %23 : vector<1x4x256xf32> to vector<4x256xf32>
    %25 = vector.shape_cast %22 : vector<4x256xf32> to vector<1x4x256xf32>
    tpu.vector_store %arg4[%c0_11, %c0_12, %c0_13], %25 {strides = array<i32>} : memref<1x4x256xf32, #tpu.memory_space<vmem>>, vector<1x4x256xf32>,
    return
  }
  func.func @transform_0(%arg0: i32) -> (i32, i32, i32) {
    %c0_i32 = arith.constant 0 : i32
    %c0_i32_0 = arith.constant 0 : i32
    %c0_i32_1 = arith.constant 0 : i32
    return %arg0, %c0_i32, %c0_i32_0 : i32, i32, i32
  }
  func.func @transform_1(%arg0: i32) -> (i32, i32) {
    %c0_i32 = arith.constant 0 : i32
    %c0_i32_0 = arith.constant 0 : i32
    %c0_i32_1 = arith.constant 0 : i32
    return %c0_i32, %c0_i32_0 : i32, i32
  }
  func.func @transform_2(%arg0: i32) -> (i32, i32) {
    %c0_i32 = arith.constant 0 : i32
    %c0_i32_0 = arith.constant 0 : i32
    %c0_i32_1 = arith.constant 0 : i32
    return %c0_i32, %c0_i32_0 : i32, i32
  }
  func.func @transform_3(%arg0: i32) -> (i32, i32, i32) {
    %c0_i32 = arith.constant 0 : i32
    %c0_i32_0 = arith.constant 0 : i32
    %c0_i32_1 = arith.constant 0 : i32
    return %arg0, %c0_i32, %c0_i32_0 : i32, i32, i32
  }
}

</mosaic_0001>

<llo_original>
// kernel: tpu_custom_call.1
$region0: #{tpu_custom_call.1}
  #allocation0 [shape = 'u32[]', space=smem, size = 0x4, offset = 0x4, fixed_abs, tag = 'smem constant byte address 0x4 - core index']
  #allocation1 [shape = 'u32[144,128]{1,0:T(1,128)}', space=vmem, size = 0x12000, scoped, tag = 'internal scratch']
  %s0 = inlined_call_operand.hbm [shape: f32[2,4,256], index: 0, kind: input, shape index: {}]
  %s1 = inlined_call_operand.vmem [shape: f32[2,4], index: 1, kind: input, shape index: {}]
  %s2 = inlined_call_operand.vmem [shape: f32[4,2], index: 2, kind: input, shape index: {}]
  %s3 = inlined_call_operand.hbm [shape: f32[2,4,256], index: 3, kind: output, shape index: {}]
  %s4 = sld [smem:[#allocation0]]
  $region49: #{tpu_custom_call.1} parent=0
    _
  %s6 = ssub.s32 1, %s4
  %s7 = scalar_select 0, %s6, %s4
  $region1: #{tpu_custom_call.1} parent=0
    #allocation2 [shape = 'u8[8192]{0}', space=vmem, size = 0x2000, scoped, tag = 'input window, operand 0']
    #allocation3 [shape = 's32[2]{0}', space=sflag, size = 0x8, scoped, tag = 'scoped memory for tpu_custom_call.1']
    #allocation4 [shape = 's32[2]{0}', space=sflag, size = 0x8, scoped, tag = 'scoped memory for tpu_custom_call.1']
    #allocation5 [shape = 'u8[8192]{0}', space=vmem, size = 0x2000, scoped, tag = 'output window, operand 0']
    %8 = vsyncpa [#allocation3], 0
    %s9 = scalar_lea.sflag [#allocation3], 1
    %10 = vsyncpa %s9, 0
    %11 = vsyncpa [#allocation4], 0
    %s12 = scalar_lea.sflag [#allocation4], 1
    %13 = vsyncpa %s12, 0
    loop: start=0, step=1, limit=4
    $region2: #{tpu_custom_call.1} parent=1 // loop_pre_header
      _
    $region3: #{tpu_custom_call.1} parent=1 // loop_header
      %s15 = sphi 0, %s19
      %p16 = scmp.ge.s32.totalorder %s15, 4
      %s25 = sphi 0, %s27
      %s28 = sphi 0, %s25
      %s29 = sphi 0, %s28
      %s45 = sphi 0, %s29
      %s49 = sphi 0, %s49
      %s51 = sphi 0, %s49
      %s52 = sphi 0, %s51
      %s66 = sphi 0, %s52
      %s70 = sphi 0, %s70
      %s72 = sphi 0, %s70
      %s73 = sphi 0, %s72
      %s87 = sphi 0, %s73
      %s93 = sphi 0, %s95
      %s96 = sphi 0, %s93
      %s97 = sphi 0, %s96
      %s113 = sphi 0, %s97
    $region4: #{tpu_custom_call.1} parent=1 // loop_header_branch
      %18 = sbr.rel (%p16) target = $region8
    $region5: #{tpu_custom_call.1} parent=1 // loop_body
      %s20 = ssub.s32 %s15, 1
      %s21 = ssub.s32 %s15, 2
      %s22 = sadd.s32 %s15, 1
      %s23 = ssub.s32 %s15, %s22
      %p24 = scmp.eq.s32.totalorder %s23, 0
      %s26 = sadd.s32 %s25, 1
      %s27 = scalar_select %p24, %s25, %s26
      %p30 = pneg %p24
      %p31 = scmp.eq.s32.totalorder %s15, 1
      %p32 = por %p30, %p31
      %p33 = scmp.ne.s32.totalorder %s25, %s28
      %p34 = scmp.eq.s32.totalorder %s15, 0
      %p35 = por %p33, %p34
      %p36 = scmp.ne.s32.totalorder %s25, %s28
      %p37 = scmp.eq.s32.totalorder %s20, 1
      %p38 = por %p36, %p37
      %p39 = scmp.ne.s32.totalorder %s28, %s29
      %p40 = scmp.eq.s32.totalorder %s20, 0
      %p41 = por %p39, %p40
      %p42 = scmp.ne.s32.totalorder %s28, %s29
      %p43 = scmp.eq.s32.totalorder %s21, 1
      %p44 = por %p42, %p43
      %p46 = scmp.ne.s32.totalorder %s29, %s45
      %p47 = scmp.eq.s32.totalorder %s21, 0
      %p48 = por %p46, %p47
      %s50 = sadd.s32 %s49, 1
      %p53 = scmp.eq.s32.totalorder %s15, 1
      %p54 = scmp.ne.s32.totalorder %s49, %s51
      %p55 = scmp.eq.s32.totalorder %s15, 0
      %p56 = por %p54, %p55
      %p57 = scmp.ne.s32.totalorder %s49, %s51
      %p58 = scmp.eq.s32.totalorder %s20, 1
      %p59 = por %p57, %p58
      %p60 = scmp.ne.s32.totalorder %s51, %s52
      %p61 = scmp.eq.s32.totalorder %s20, 0
      %p62 = por %p60, %p61
      %p63 = scmp.ne.s32.totalorder %s51, %s52
      %p64 = scmp.eq.s32.totalorder %s21, 1
      %p65 = por %p63, %p64
      %p67 = scmp.ne.s32.totalorder %s52, %s66
      %p68 = scmp.eq.s32.totalorder %s21, 0
      %p69 = por %p67, %p68
      %s71 = sadd.s32 %s70, 1
      %p74 = scmp.eq.s32.totalorder %s15, 1
      %p75 = scmp.ne.s32.totalorder %s70, %s72
      %p76 = scmp.eq.s32.totalorder %s15, 0
      %p77 = por %p75, %p76
      %p78 = scmp.ne.s32.totalorder %s70, %s72
      %p79 = scmp.eq.s32.totalorder %s20, 1
      %p80 = por %p78, %p79
      %p81 = scmp.ne.s32.totalorder %s72, %s73
      %p82 = scmp.eq.s32.totalorder %s20, 0
      %p83 = por %p81, %p82
      %p84 = scmp.ne.s32.totalorder %s72, %s73
      %p85 = scmp.eq.s32.totalorder %s21, 1
      %p86 = por %p84, %p85
      %p88 = scmp.ne.s32.totalorder %s73, %s87
      %p89 = scmp.eq.s32.totalorder %s21, 0
      %p90 = por %p88, %p89
      %s91 = ssub.s32 %s15, %s22
      %p92 = scmp.eq.s32.totalorder %s91, 0
      %s94 = sadd.s32 %s93, 1
      %s95 = scalar_select %p92, %s93, %s94
      %p98 = pneg %p92
      %p99 = scmp.eq.s32.totalorder %s15, 1
      %p100 = por %p98, %p99
      %p101 = scmp.ne.s32.totalorder %s93, %s96
      %p102 = scmp.eq.s32.totalorder %s15, 0
      %p103 = por %p101, %p102
      %p104 = scmp.ne.s32.totalorder %s93, %s96
      %p105 = scmp.eq.s32.totalorder %s20, 1
      %p106 = por %p104, %p105
      %p107 = scmp.ne.s32.totalorder %s96, %s97
      %p108 = scmp.eq.s32.totalorder %s20, 0
      %p109 = por %p107, %p108
      %p110 = scmp.ne.s32.totalorder %s96, %s97
      %p111 = scmp.eq.s32.totalorder %s21, 1
      %p112 = por %p110, %p111
      %p114 = scmp.ne.s32.totalorder %s97, %s113
      %p115 = scmp.eq.s32.totalorder %s21, 0
      %p116 = por %p114, %p115
      %p117 = scmp.le.s32.totalorder 1, %s15
      %p118 = scmp.lt.s32.totalorder %s15, 3
      %p119 = pnand %p117, %p118
      %p120 = pneg %p119
      // Predicated region
      $region9: #{tpu_custom_call.1} parent=5 // pred_check
        _
      $region10: #{tpu_custom_call.1} parent=5 // pred_check_branch
        %122 = sbr.rel (%p119) target = $region12
      $region11: #{tpu_custom_call.1} parent=5 // pred_region
        %s123 = ssub.s32 %s15, 1
        // Predicated region
        $region13: #{tpu_custom_call.1} parent=11 // pred_check
          %p124 = pneg %p62
        $region14: #{tpu_custom_call.1} parent=11 // pred_check_branch
          %126 = sbr.rel (%p124) target = $region16
        $region15: #{tpu_custom_call.1} parent=11 // pred_region
          _
        $region16: #{tpu_custom_call.1} parent=11 // pred_fallthru
          _
        // Predicated region
        $region17: #{tpu_custom_call.1} parent=11 // pred_check
          %p127 = pneg %p83
        $region18: #{tpu_custom_call.1} parent=11 // pred_check_branch
          %129 = sbr.rel (%p127) target = $region20
        $region19: #{tpu_custom_call.1} parent=11 // pred_region
          _
        $region20: #{tpu_custom_call.1} parent=11 // pred_fallthru
          _
      $region12: #{tpu_custom_call.1} parent=5 // pred_fallthru
        _
      %p130 = scmp.lt.s32.totalorder %s15, 2
      // Predicated region
      $region21: #{tpu_custom_call.1} parent=5 // pred_check
        %p131 = pneg %p130
      $region22: #{tpu_custom_call.1} parent=5 // pred_check_branch
        %133 = sbr.rel (%p131) target = $region24
      $region23: #{tpu_custom_call.1} parent=5 // pred_region
        // Predicated region
        $region25: #{tpu_custom_call.1} parent=23 // pred_check
          %p134 = pneg %p35
        $region26: #{tpu_custom_call.1} parent=23 // pred_check_branch
          %136 = sbr.rel (%p134) target = $region28
        $region27: #{tpu_custom_call.1} parent=23 // pred_region
          %s137 = sand.u32 %s25, 1
          %s138 = scalar_lea.sflag [#allocation3], %s137
          %s139 = sand.u32 %s25, 1
          %s140 = smul.addr %s139, 8
          %s141 = scalar_lea.vmem [#allocation2], %s140
          %s143 = ssub.s32 128, 128
          %144 = vsyncadd %s138, %s143
          %s145 = smul.addr %s15, 2
          %s146 = smul.addr %s145, 64
          %s147 = scalar_lea.hbm %s0, %s146
          %s149 = sshll.u32 %s141, 4
          %s150 = int_to_ptr.vmem [resolvable:$true] %s149
          %152 = dma.hbm_to_vmem [thread:$0]  %s147, 128, %s150, %s138
        $region28: #{tpu_custom_call.1} parent=23 // pred_fallthru
          _
      $region24: #{tpu_custom_call.1} parent=5 // pred_fallthru
        _
      %p153 = scmp.le.s32.totalorder 1, %s15
      %p154 = scmp.lt.s32.totalorder %s15, 3
      %p155 = pnand %p153, %p154
      %p156 = pneg %p155
      // Predicated region
      $region29: #{tpu_custom_call.1} parent=5 // pred_check
        _
      $region30: #{tpu_custom_call.1} parent=5 // pred_check_branch
        %158 = sbr.rel (%p155) target = $region32
      $region31: #{tpu_custom_call.1} parent=5 // pred_region
        %s159 = ssub.s32 %s15, 1
        %s160 = sand.u32 %s28, 1
        %s161 = scalar_lea.sflag [#allocation3], %s160
        %s162 = sand.u32 %s28, 1
        %s163 = smul.addr %s162, 8
        %s164 = scalar_lea.vmem [#allocation2], %s163
        // Predicated region
        $region33: #{tpu_custom_call.1} parent=31 // pred_check
          %p165 = pneg %p41
        $region34: #{tpu_custom_call.1} parent=31 // pred_check_branch
          %167 = sbr.rel (%p165) target = $region36
        $region35: #{tpu_custom_call.1} parent=31 // pred_region
          %168 = dma.done %s161, 128
        $region36: #{tpu_custom_call.1} parent=31 // pred_fallthru
          _
        %s169 = sand.u32 %s28, 1
        %s170 = scalar_lea.sflag [#allocation3], %s169
        %s171 = sand.u32 %s28, 1
        %s172 = smul.addr %s171, 8
        %s173 = scalar_lea.vmem [#allocation2], %s172
        %p174 = pneg %p41
        %p175 = pneg %p38
        %p176 = pneg %p62
        %p177 = pneg %p59
        %p178 = pneg %p83
        %p179 = pneg %p80
        %p180 = pneg %p109
        %p181 = pneg %p106
        %s182 = sand.u32 %s96, 1
        %s183 = scalar_lea.sflag [#allocation4], %s182
        %s184 = sand.u32 %s96, 1
        %s185 = smul.addr %s184, 8
        %s186 = scalar_lea.vmem [#allocation5], %s185
        %v187 = vld [vmem:[%s164] sm:$0xff]
        %v189 = vcombine.high %v187, %v187
        %vm191 = vcmask 1043456
        %v192 = vsel %vm191, %v187, 0.0
        %v193 = vsel %vm191, %v189, 0.0
        %v194 = vadd.f32 %v192, %v193
        %195 = vadd.xlane.f32.xlu0 %v194
        %v196 = vpop.xlane.xlu0 %195
        %v197 = vmul.f32 %v196, 0.00390625
        %v198 = vld [vmem:[%s1] sm:$0x3]
        %vm199 = vcmask 31744
        %v201 = vsel %vm199, %v198, 0
        %v204 = vsel %vm191, %v197, 0
        %206 = vmatprep.subr.mxu0 0.0
        %207 = vmatpush1.msra.mxu0 %v204
        %208 = vmatprep.subr.mxu0 0.0
        %209 = vmatpush1.msra.mxu0 0.0
        %210 = vmatprep.subr.mxu0 0.0
        %211 = vmatpush1.msra.mxu0 0.0
        %212 = vmatprep.subr.mxu0 0.0
        %213 = vmatpush1.msra.mxu0 0.0
        %214 = vmatprep.subr.mxu0 0.0
        %215 = vmatpush1.msra.mxu0 0.0
        %216 = vmatprep.subr.mxu0 0.0
        %217 = vmatpush1.msra.mxu0 0.0
        %218 = vmatprep.subr.mxu0 0.0
        %219 = vmatpush1.msra.mxu0 0.0
        %220 = vmatprep.subr.mxu0 0.0
        %221 = vmatpush1.msra.mxu0 0.0
        %222 = vmatprep.subr.mxu0 0.0
        %223 = vmatpush1.msra.mxu0 0.0
        %224 = vmatprep.subr.mxu0 0.0
        %225 = vmatpush1.msra.mxu0 0.0
        %226 = vmatprep.subr.mxu0 0.0
        %227 = vmatpush1.msra.mxu0 0.0
        %228 = vmatprep.subr.mxu0 0.0
        %229 = vmatpush1.msra.mxu0 0.0
        %230 = vmatprep.subr.mxu0 0.0
        %231 = vmatpush1.msra.mxu0 0.0
        %232 = vmatprep.subr.mxu0 0.0
        %233 = vmatpush1.msra.mxu0 0.0
        %234 = vmatprep.subr.mxu0 0.0
        %235 = vmatpush1.msra.mxu0 0.0
        %236 = vmatprep.subr.mxu0 0.0
        %237 = vmatpush1.msra.mxu0 0.0
        %238 = vmatprep.subr.mxu0 0.0
        %239 = vmatpush1.msra.mxu0 0.0
        %240 = vmatprep.subr.mxu0 0.0
        %241 = vmatpush1.msra.mxu0 0.0
        %242 = vmatprep.subr.mxu0 0.0
        %243 = vmatpush1.msra.mxu0 0.0
        %244 = vmatprep.subr.mxu0 0.0
        %245 = vmatpush1.msra.mxu0 0.0
        %246 = vmatprep.subr.mxu0 0.0
        %247 = vmatpush1.msra.mxu0 0.0
        %248 = vmatprep.subr.mxu0 0.0
        %249 = vmatpush1.msra.mxu0 0.0
        %250 = vmatprep.subr.mxu0 0.0
        %251 = vmatpush1.msra.mxu0 0.0
        %252 = vmatprep.subr.mxu0 0.0
        %253 = vmatpush1.msra.mxu0 0.0
        %254 = vmatprep.subr.mxu0 0.0
        %255 = vmatpush1.msra.mxu0 0.0
        %256 = vmatprep.subr.mxu0 0.0
        %257 = vmatpush1.msra.mxu0 0.0
        %258 = vmatprep.subr.mxu0 0.0
        %259 = vmatpush1.msra.mxu0 0.0
        %260 = vmatprep.subr.mxu0 0.0
        %261 = vmatpush1.msra.mxu0 0.0
        %262 = vmatprep.subr.mxu0 0.0
        %263 = vmatpush1.msra.mxu0 0.0
        %264 = vmatprep.subr.mxu0 0.0
        %265 = vmatpush1.msra.mxu0 0.0
        %266 = vmatprep.subr.mxu0 0.0
        %267 = vmatpush1.msra.mxu0 0.0
        %268 = vmatprep.subr.mxu0 0.0
        %269 = vmatpush1.msra.mxu0 0.0
        %270 = vmatprep.mubr.f32.mxu0 0.0
        %271 = vmatmul.mubr.f32.gmra.mrb[0].mxu0 %v201
        %v272 = vpop.f32.mrb[0].mxu0
        %v273 = vadd.f32 0.0, %v272
        %v274 = vpop.f32.mrb[0].mxu0
        %275 = vdwg.mxu0
        %v276 = vxor.u32 %v273, 2147483648
        %v277 = vmul.f32 %v276, 1.442695
        %v278 = vpow.pop %v277
        %v279 = vadd.f32 %v278, 1.0
        %v280 = vrcp.pop %v279
        %v281 = vmul.f32 1.0, %v280
        %v282 = vmul.f32 %v273, %v281
        %v283 = vld [vmem:[%s2] sm:$0xf]
        %vm284 = vcmask 15360
        %v286 = vsel %vm284, %v283, 0
        %vm288 = vcmask 1041408
        %v290 = vsel %vm288, %v282, 0
        %292 = vmatprep.subr.mxu0 0.0
        %293 = vmatpush1.msra.mxu0 %v290
        %294 = vmatprep.subr.mxu0 0.0
        %295 = vmatpush1.msra.mxu0 0.0
        %296 = vmatprep.subr.mxu0 0.0
        %297 = vmatpush1.msra.mxu0 0.0
        %298 = vmatprep.subr.mxu0 0.0
        %299 = vmatpush1.msra.mxu0 0.0
        %300 = vmatprep.subr.mxu0 0.0
        %301 = vmatpush1.msra.mxu0 0.0
        %302 = vmatprep.subr.mxu0 0.0
        %303 = vmatpush1.msra.mxu0 0.0
        %304 = vmatprep.subr.mxu0 0.0
        %305 = vmatpush1.msra.mxu0 0.0
        %306 = vmatprep.subr.mxu0 0.0
        %307 = vmatpush1.msra.mxu0 0.0
        %308 = vmatprep.subr.mxu0 0.0
        %309 = vmatpush1.msra.mxu0 0.0
        %310 = vmatprep.subr.mxu0 0.0
        %311 = vmatpush1.msra.mxu0 0.0
        %312 = vmatprep.subr.mxu0 0.0
        %313 = vmatpush1.msra.mxu0 0.0
        %314 = vmatprep.subr.mxu0 0.0
        %315 = vmatpush1.msra.mxu0 0.0
        %316 = vmatprep.subr.mxu0 0.0
        %317 = vmatpush1.msra.mxu0 0.0
        %318 = vmatprep.subr.mxu0 0.0
        %319 = vmatpush1.msra.mxu0 0.0
        %320 = vmatprep.subr.mxu0 0.0
        %321 = vmatpush1.msra.mxu0 0.0
        %322 = vmatprep.subr.mxu0 0.0
        %323 = vmatpush1.msra.mxu0 0.0
        %324 = vmatprep.subr.mxu0 0.0
        %325 = vmatpush1.msra.mxu0 0.0
        %326 = vmatprep.subr.mxu0 0.0
        %327 = vmatpush1.msra.mxu0 0.0
        %328 = vmatprep.subr.mxu0 0.0
        %329 = vmatpush1.msra.mxu0 0.0
        %330 = vmatprep.subr.mxu0 0.0
        %331 = vmatpush1.msra.mxu0 0.0
        %332 = vmatprep.subr.mxu0 0.0
        %333 = vmatpush1.msra.mxu0 0.0
        %334 = vmatprep.subr.mxu0 0.0
        %335 = vmatpush1.msra.mxu0 0.0
        %336 = vmatprep.subr.mxu0 0.0
        %337 = vmatpush1.msra.mxu0 0.0
        %338 = vmatprep.subr.mxu0 0.0
        %339 = vmatpush1.msra.mxu0 0.0
        %340 = vmatprep.subr.mxu0 0.0
        %341 = vmatpush1.msra.mxu0 0.0
        %342 = vmatprep.subr.mxu0 0.0
        %343 = vmatpush1.msra.mxu0 0.0
        %344 = vmatprep.subr.mxu0 0.0
        %345 = vmatpush1.msra.mxu0 0.0
        %346 = vmatprep.subr.mxu0 0.0
        %347 = vmatpush1.msra.mxu0 0.0
        %348 = vmatprep.subr.mxu0 0.0
        %349 = vmatpush1.msra.mxu0 0.0
        %350 = vmatprep.subr.mxu0 0.0
        %351 = vmatpush1.msra.mxu0 0.0
        %352 = vmatprep.subr.mxu0 0.0
        %353 = vmatpush1.msra.mxu0 0.0
        %354 = vmatprep.subr.mxu0 0.0
        %355 = vmatpush1.msra.mxu0 0.0
        %356 = vmatprep.mubr.f32.mxu0 0.0
        %357 = vmatmul.mubr.f32.gmra.mrb[0].mxu0 %v286
        %v358 = vpop.f32.mrb[0].mxu0
        %v359 = vadd.f32 0.0, %v358
        %v360 = vpop.f32.mrb[0].mxu0
        %361 = vdwg.mxu0
        %v362 = vxor.u32 %v359, 2147483648
        %v363 = vmul.f32 %v362, 1.442695
        %v364 = vpow.pop %v363
        %v365 = vadd.f32 %v364, 1.0
        %v366 = vrcp.pop %v365
        %v367 = vmul.f32 1.0, %v366
        %369 = vset.pattern.permute.xlu0 0
        %370 = vperm.xlu0 %369, %v367
        %v371 = vpop.permute.xlu0 %370
        %v373 = vunpack.c.l.s4 839922192
        %v374 = vunpack.c.0.s8 %v373
        %v375 = vlaneseq
        %v376 = vshrl.u32 %v375, 7
        %v377 = vsub.s32 %v374, %v376
        %v378 = vrot.slane %v371, %v377
        %v380 = vmul.f32 %v187, %v378
        %381 = vst [vmem:[%s186] sm:$0xff] %v380
        %s382 = sand.u32 %s96, 1
        %s383 = scalar_lea.sflag [#allocation4], %s382
        %s384 = sand.u32 %s96, 1
        %s385 = smul.addr %s384, 8
        %s386 = scalar_lea.vmem [#allocation5], %s385
        // Predicated region
        $region37: #{tpu_custom_call.1} parent=31 // pred_check
          %p387 = pneg %p106
        $region38: #{tpu_custom_call.1} parent=31 // pred_check_branch
          %389 = sbr.rel (%p387) target = $region40
        $region39: #{tpu_custom_call.1} parent=31 // pred_region
          %s391 = ssub.s32 128, 128
          %392 = vsyncadd %s383, %s391
          %s393 = smul.addr %s20, 2
          %s394 = smul.addr %s393, 64
          %s395 = scalar_lea.hbm %s3, %s394
          %s397 = sshll.u32 %s386, 4
          %s398 = int_to_ptr.vmem [resolvable:$true] %s397
          %400 = dma.vmem_to_hbm [thread:$0]  %s398, 128, %s395, %s383
        $region40: #{tpu_custom_call.1} parent=31 // pred_fallthru
          _
      $region32: #{tpu_custom_call.1} parent=5 // pred_fallthru
        _
      %p401 = scmp.le.s32.totalorder 2, %s15
      // Predicated region
      $region41: #{tpu_custom_call.1} parent=5 // pred_check
        %p402 = pneg %p401
      $region42: #{tpu_custom_call.1} parent=5 // pred_check_branch
        %404 = sbr.rel (%p402) target = $region44
      $region43: #{tpu_custom_call.1} parent=5 // pred_region
        %s405 = ssub.s32 %s15, 2
        // Predicated region
        $region45: #{tpu_custom_call.1} parent=43 // pred_check
          %p406 = pneg %p112
        $region46: #{tpu_custom_call.1} parent=43 // pred_check_branch
          %408 = sbr.rel (%p406) target = $region48
        $region47: #{tpu_custom_call.1} parent=43 // pred_region
          %s409 = sand.u32 %s97, 1
          %s410 = scalar_lea.sflag [#allocation4], %s409
          %s411 = sand.u32 %s97, 1
          %s412 = smul.addr %s411, 8
          %s413 = scalar_lea.vmem [#allocation5], %s412
          %414 = dma.done %s410, 128
        $region48: #{tpu_custom_call.1} parent=43 // pred_fallthru
          _
      $region44: #{tpu_custom_call.1} parent=5 // pred_fallthru
        _
    $region6: #{tpu_custom_call.1} parent=1 // loop_footer
      %s19 = sadd.s32 1, %s15
    $region7: #{tpu_custom_call.1} parent=1 // loop_footer_branch
      %14 = sbr.rel target = $region3
    $region8: #{tpu_custom_call.1} parent=1 // loop_exit
      _
    %415 = vsyncpa [#allocation3], 1
    %s416 = scalar_lea.sflag [#allocation3], 1
    %417 = vsyncpa %s416, 1
    %418 = vsyncpa [#allocation4], 1
    %s419 = scalar_lea.sflag [#allocation4], 1
    %420 = vsyncpa %s419, 1

</llo_original>
